<compile_context>
chip_gen: v7x
topology: tpu7x:2x2x1
jax: 0.10.0
libtpu: 0.0.40
codegen_flags: <defaults>
</compile_context>

<pallas_src>
import math
import functools

import jax
import jax.numpy as jnp
from jax import lax
from jax.experimental import pallas as pl
from jax.experimental.pallas import tpu as pltpu

_EPS = 1e-12


def _arc_margin_kernel(*refs, cos_m, sin_m, th, mm, s, easy_margin, tile_c,
                       has_inv_w):
    # refs (has_inv_w=False): xn (B,E), w (tile_c,E), label (B,1), out (B,tile_c)
    # refs (has_inv_w=True):  xn, w, inv_w (1,tile_c), label, out
    if has_inv_w:
        xn_ref, w_ref, invw_ref, label_ref, o_ref = refs
    else:
        xn_ref, w_ref, label_ref, o_ref = refs

    xn = xn_ref[...]
    w = w_ref[...]

    # Raw dot: xn @ w.T, contracting the last dims directly on the MXU
    # (no transpose of the weight tile), f32 accumulation.
    dot = lax.dot_general(
        xn, w, dimension_numbers=(((1,), (1,)), ((), ())),
        preferred_element_type=jnp.float32)                    # (B, tile_c)

    if has_inv_w:
        inv_w = invw_ref[...]                                   # (1, tile_c) f32
    else:
        # Per-class inverse L2 norm of the W tile, computed entirely in the
        # streaming dtype: the ones-row MXU contraction of w*w produces the
        # sum-of-squares already lane-major as (1, tile_c) with f32 accumulate.
        # No f32 materialization of the (tile_c, E) tile.
        ones_row = jnp.ones((1, w.shape[1]), w.dtype)
        ssq = lax.dot_general(
            ones_row, w * w, dimension_numbers=(((1,), (1,)), ((), ())),
            preferred_element_type=jnp.float32)                 # (1, tile_c)
        inv_w = lax.rsqrt(jnp.maximum(ssq, _EPS * _EPS))        # 1/max(||w||,eps)

    cosine = dot * inv_w                                        # (B, tile_c) f32

    # Keep the clamp: post-matmul scaling can leave |cosine| slightly > 1.
    sine = jnp.sqrt(jnp.maximum(1.0 - cosine * cosine, 0.0))
    phi = cosine * cos_m - sine * sin_m
    if easy_margin:
        phi = jnp.where(cosine > 0.0, phi, cosine)
    else:
        phi = jnp.where(cosine > th, phi, cosine - mm)

    # one_hot.scatter_(1, label, 1) blend == single select on (class id == label).
    # The iota is a per-step constant; the grid offset is folded into the
    # (B, 1) label column instead of a full (B, tile_c) VPU add.
    col = lax.broadcasted_iota(jnp.int32, cosine.shape, 1)
    tgt = label_ref[...] - pl.program_id(0) * tile_c            # (B, 1)
    o_ref[...] = (jnp.where(col == tgt, phi, cosine) * s).astype(o_ref.dtype)


def _vmem_need_bytes(B, E, tile_c, w_isz, x_isz, out_isz, has_inv_w):
    """VMEM footprint estimate for one pipelined grid step (no f32 W temps)."""
    need = (2 * tile_c * E * w_isz        # double-buffered W stream
            + 2 * B * E * x_isz           # resident x (pipeline allocs 2 bufs)
            + 2 * B * 4                   # resident labels
            + 2 * B * tile_c * out_isz    # double-buffered output tile
            + 6 * B * tile_c * 4)         # f32 elementwise temporaries
    if has_inv_w:
        need += 2 * tile_c * 4            # streamed inverse-norm row
    return need


def _choose_tile_c(C, E, B, w_isz, x_isz, out_isz, has_inv_w,
                   requested, vmem_budget):
    """Largest 128-multiple tile that divides C and fits the VMEM budget."""
    if C <= 128:
        return C
    assert C % 128 == 0, "num_classes must be a multiple of 128 (or <= 128)"
    requested = max(128, (requested // 128) * 128)
    if C >= 1024:
        # keep >= 2 grid steps so double-buffering / megacore sharding has work
        requested = min(requested, C // 2)
    tc = min(requested, C)
    while C % tc:
        tc -= 128
    while tc > 128 and _vmem_need_bytes(B, E, tc, w_isz, x_isz, out_isz,
                                        has_inv_w) > vmem_budget:
        tc -= 128
        while C % tc:
            tc -= 128
    return tc


def _vmem_budget_bytes():
    """Generation-aware VMEM budget: ~48 MiB on v7x (64 MiB physical),
    ~100 MiB on v5e/v6e (128 MiB physical)."""
    cap = None
    try:
        cap = getattr(pltpu.get_tpu_info(), "vmem_capacity_bytes", None)
    except Exception:
        cap = None
    if not cap:
        try:
            kind = jax.devices()[0].device_kind.lower()
        except Exception:
            kind = ""
        cap = (64 << 20) if "v7" in kind else (128 << 20)
    return int(min(cap - (16 << 20), 100 << 20))


def arc_margin_forward(x, weight, label, *,
                       margin_m=0.5, margin_s=64.0, easy_margin=False,
                       tile_c=4096, mxu_dtype=jnp.float32,
                       out_dtype=jnp.float32, precompute_w_norm=False,
                       vmem_budget_bytes=None):
    """ArcFace margin head forward.  Returns (B, num_classes) logits.

    mxu_dtype=jnp.bfloat16 streams W (and resident normalized x) in bf16 —
    roughly halves HBM traffic in the W-stream-bound regime while keeping f32
    accumulation and f32 elementwise math.  out_dtype=jnp.bfloat16 halves the
    output write stream (useful once B >~ E/2).  precompute_w_norm=True is a
    serving-only option (W static across calls).
    """
    B, E = x.shape
    C, E2 = weight.shape
    assert E == E2

    cos_m = math.cos(margin_m)
    sin_m = math.sin(margin_m)
    th = math.cos(math.pi - margin_m)
    mm = math.sin(math.pi - margin_m) * margin_m

    # Hoisted x normalization (done once; x is resident across all class tiles).
    x32 = x.astype(jnp.float32)
    x_n = x32 * lax.rsqrt(
        jnp.maximum(jnp.sum(x32 * x32, axis=1, keepdims=True), _EPS * _EPS))
    x_n = x_n.astype(mxu_dtype)
    w_in = weight.astype(mxu_dtype)
    label2d = label.reshape(B, 1).astype(jnp.int32)

    inv_w = None
    if precompute_w_norm:
        # Serving path: W reused across calls, so compute 1/||w|| once (from
        # f32 weights) and stream it as a tiny (1, tile_c) row.
        # TODO(synk): keep this off for training — it re-reads W from HBM.
        w32 = weight.astype(jnp.float32)
        inv_w = lax.rsqrt(jnp.maximum(jnp.sum(w32 * w32, axis=1), _EPS * _EPS))
        inv_w = inv_w.reshape(1, C).astype(jnp.float32)

    # Pad the embedding dim to a lane multiple: zero columns are free for both
    # the dot and the norm and avoid lane-padding waste in VMEM / vregs.
    E_pad = max(128, ((E + 127) // 128) * 128)
    if E_pad != E:
        x_n = jnp.pad(x_n, ((0, 0), (0, E_pad - E)))
        w_in = jnp.pad(w_in, ((0, 0), (0, E_pad - E)))

    w_isz = jnp.dtype(mxu_dtype).itemsize
    out_isz = jnp.dtype(out_dtype).itemsize
    budget = (vmem_budget_bytes if vmem_budget_bytes is not None
              else _vmem_budget_bytes())
    tile_c = _choose_tile_c(C, E_pad, B, w_isz, w_isz, out_isz,
                            inv_w is not None, tile_c, budget)
    assert C % tile_c == 0

    need = _vmem_need_bytes(B, E_pad, tile_c, w_isz, w_isz, out_isz,
                            inv_w is not None)
    # Explicit limit: need + fixed headroom, never above the per-chip budget.
    vmem_limit = int(min(max(need + (8 << 20), 32 << 20), budget))

    kernel = functools.partial(
        _arc_margin_kernel,
        cos_m=cos_m, sin_m=sin_m, th=th, mm=mm, s=margin_s,
        easy_margin=easy_margin, tile_c=tile_c, has_inv_w=inv_w is not None)

    in_specs = [
        pl.BlockSpec((B, E_pad), lambda j: (0, 0)),          # x_n (resident)
        pl.BlockSpec((tile_c, E_pad), lambda j: (j, 0)),     # W tile (streamed)
    ]
    args = [x_n, w_in]
    if inv_w is not None:
        in_specs.append(pl.BlockSpec((1, tile_c), lambda j: (0, j)))
        args.append(inv_w)
    in_specs.append(pl.BlockSpec((B, 1), lambda j: (0, 0)))  # labels (resident)
    args.append(label2d)

    grid = (C // tile_c,)
    return pl.pallas_call(
        kernel,
        out_shape=jax.ShapeDtypeStruct((B, C), out_dtype),
        grid_spec=pltpu.PrefetchScalarGridSpec(
            num_scalar_prefetch=0,
            grid=grid,
            in_specs=in_specs,
            out_specs=pl.BlockSpec((B, tile_c), lambda j: (0, j)),
        ),
        compiler_params=pltpu.CompilerParams(
            dimension_semantics=("parallel",),   # class tiles shard across cores
            vmem_limit_bytes=vmem_limit),
    )(*args)


def _reference(x, weight, label, *, margin_m=0.5, margin_s=64.0,
               easy_margin=False):
    """Pure-JAX reference mirroring the PyTorch forward."""
    cos_m, sin_m = math.cos(margin_m), math.sin(margin_m)
    th = math.cos(math.pi - margin_m)
    mm = math.sin(math.pi - margin_m) * margin_m
    xn = x / jnp.maximum(jnp.linalg.norm(x, axis=1, keepdims=True), _EPS)
    wn = weight / jnp.maximum(jnp.linalg.norm(weight, axis=1, keepdims=True),
                              _EPS)
    cosine = xn @ wn.T
    sine = jnp.sqrt(jnp.maximum(1.0 - cosine ** 2, 0.0))
    phi = cosine * cos_m - sine * sin_m
    if easy_margin:
        phi = jnp.where(cosine > 0.0, phi, cosine)
    else:
        phi = jnp.where(cosine > th, phi, cosine - mm)
    one_hot = jax.nn.one_hot(label, cosine.shape[1], dtype=cosine.dtype)
    return (one_hot * phi + (1.0 - one_hot) * cosine) * margin_s


if __name__ == "__main__":
    # Small, module-consistent shapes: batch=8, emb_size=32, num_classes=256.
    B, E, C = 8, 32, 256
    key = jax.random.PRNGKey(0)
    kx, kw, kl = jax.random.split(key, 3)

    x = jax.random.normal(kx, (B, E), dtype=jnp.float32)
    # Deterministic Xavier-uniform init for the weight Parameter (C, E).
    limit = math.sqrt(6.0 / (C + E))
    weight = jax.random.uniform(kw, (C, E), dtype=jnp.float32,
                                minval=-limit, maxval=limit)
    label = jax.random.randint(kl, (B,), 0, C, dtype=jnp.int32)

    ref = _reference(x, weight, label,
                     margin_m=0.5, margin_s=64.0, easy_margin=False)

    # f32 path: tight tolerance against the reference.
    out = jax.block_until_ready(
        arc_margin_forward(x, weight, label,
                           margin_m=0.5, margin_s=64.0, easy_margin=False))
    assert out.shape == (B, C)
    assert jnp.allclose(out, ref, atol=1e-4, rtol=1e-4), \
        f"f32 max abs err {jnp.max(jnp.abs(out - ref))}"

    # easy_margin variant (f32).
    ref_em = _reference(x, weight, label,
                        margin_m=0.5, margin_s=64.0, easy_margin=True)
    out_em = jax.block_until_ready(
        arc_margin_forward(x, weight, label,
                           margin_m=0.5, margin_s=64.0, easy_margin=True))
    assert jnp.allclose(out_em, ref_em, atol=1e-4, rtol=1e-4), \
        f"easy_margin max abs err {jnp.max(jnp.abs(out_em - ref_em))}"

    # bf16 weight-streaming path (HBM-bound lever): errors scale with s=64,
    # so use bf16-appropriate tolerances.
    out_bf16 = jax.block_until_ready(
        arc_margin_forward(x, weight, label,
                           margin_m=0.5, margin_s=64.0, easy_margin=False,
                           mxu_dtype=jnp.bfloat16))
    assert jnp.allclose(out_bf16, ref, atol=0.75, rtol=5e-2), \
        f"bf16 max abs err {jnp.max(jnp.abs(out_bf16 - ref))}"

    # Serving path: precomputed f32 inverse weight norms streamed as a row.
    out_pre = jax.block_until_ready(
        arc_margin_forward(x, weight, label,
                           margin_m=0.5, margin_s=64.0, easy_margin=False,
                           precompute_w_norm=True))
    assert jnp.allclose(out_pre, ref, atol=1e-4, rtol=1e-4), \
        f"precomputed-norm max abs err {jnp.max(jnp.abs(out_pre - ref))}"

    print("KERNEL_OK")
</pallas_src>

<mosaic_0001>
module attributes {stable_mosaic.version = 11 : i64} {
  func.func @_arc_margin_kernel(%arg0: i32, %arg1: memref<8x128xf32, #tpu.memory_space<vmem>>, %arg2: memref<256x128xf32, #tpu.memory_space<vmem>>, %arg3: memref<8x1xi32, #tpu.memory_space<vmem>>, %arg4: memref<8x256xf32, #tpu.memory_space<vmem>>) attributes {dimension_semantics = [#tpu.dimension_semantics<parallel>], iteration_bounds = array<i64: 1>, scalar_prefetch = 0 : i64, scratch_operands = 0 : i64, tpu.core_type = #tpu.core_type<tc>, window_params = [{pipeline_mode = #tpu.pipeline_mode<synchronous>, transform_indices = @transform_0, window_bounds = array<i64: 8, 128>}, {transform_indices = @transform_1, window_bounds = array<i64: 256, 128>}, {pipeline_mode = #tpu.pipeline_mode<synchronous>, transform_indices = @transform_2, window_bounds = array<i64: 8, 1>}, {transform_indices = @transform_3, window_bounds = array<i64: 8, 256>}]} {
    %c0 = arith.constant 0 : index
    %c0_0 = arith.constant 0 : index
    %0 = vector.load %arg1[%c0, %c0_0] : memref<8x128xf32, #tpu.memory_space<vmem>>, vector<8x128xf32>
    %c0_1 = arith.constant 0 : index
    %c0_2 = arith.constant 0 : index
    %1 = vector.load %arg2[%c0_1, %c0_2] : memref<256x128xf32, #tpu.memory_space<vmem>>, vector<256x128xf32>
    %cst = arith.constant dense<0.000000e+00> : vector<8x256xf32>
    %2 = tpu.matmul %0, %1, %cst {dimension_numbers = #tpu.dot_dimension_numbers<[1], [1], [0], [0], [0, 0, 1, 0], [], []>} : vector<8x128xf32>, vector<256x128xf32>, vector<8x256xf32> -> vector<8x256xf32>
    %cst_3 = arith.constant 1.000000e+00 : f32
    %3 = vector.broadcast %cst_3 : f32 to vector<1x128xf32>
    %4 = arith.mulf %1, %1 : vector<256x128xf32>
    %cst_4 = arith.constant dense<0.000000e+00> : vector<1x256xf32>
    %5 = tpu.matmul %3, %4, %cst_4 {dimension_numbers = #tpu.dot_dimension_numbers<[1], [1], [0], [0], [0, 0, 1, 0], [], []>} : vector<1x128xf32>, vector<256x128xf32>, vector<1x256xf32> -> vector<1x256xf32>
    %cst_5 = arith.constant 1.000000e-24 : f32
    %6 = vector.broadcast %cst_5 : f32 to vector<1x256xf32>
    %7 = arith.maximumf %5, %6 : vector<1x256xf32>
    %8 = math.rsqrt %7 : vector<1x256xf32>
    %9 = vector.broadcast %8 : vector<1x256xf32> to vector<8x256xf32>
    %10 = arith.mulf %2, %9 : vector<8x256xf32>
    %11 = arith.mulf %10, %10 : vector<8x256xf32>
    %cst_6 = arith.constant 1.000000e+00 : f32
    %12 = vector.broadcast %cst_6 : f32 to vector<8x256xf32>
    %13 = arith.subf %12, %11 : vector<8x256xf32>
    %cst_7 = arith.constant 0.000000e+00 : f32
    %14 = vector.broadcast %cst_7 : f32 to vector<8x256xf32>
    %15 = arith.maximumf %13, %14 : vector<8x256xf32>
    %16 = math.sqrt %15 : vector<8x256xf32>
    %cst_8 = arith.constant 0.87758255 : f32
    %17 = vector.broadcast %cst_8 : f32 to vector<8x256xf32>
    %18 = arith.mulf %10, %17 : vector<8x256xf32>
    %cst_9 = arith.constant 0.47942555 : f32
    %19 = vector.broadcast %cst_9 : f32 to vector<8x256xf32>
    %20 = arith.mulf %16, %19 : vector<8x256xf32>
    %21 = arith.subf %18, %20 : vector<8x256xf32>
    %cst_10 = arith.constant -0.87758255 : f32
    %22 = vector.broadcast %cst_10 : f32 to vector<8x256xf32>
    %23 = arith.cmpf ogt, %10, %22 : vector<8x256xf32>
    %cst_11 = arith.constant 0.239712775 : f32
    %24 = vector.broadcast %cst_11 : f32 to vector<8x256xf32>
    %25 = arith.subf %10, %24 : vector<8x256xf32>
    %26 = arith.select %23, %21, %25 : vector<8x256xi1>, vector<8x256xf32>
    %27 = tpu.iota {dimensions = array<i32: 1>} : vector<8x256xi32>
    %c0_12 = arith.constant 0 : index
    %c0_13 = arith.constant 0 : index
    %28 = vector.load %arg3[%c0_12, %c0_13] : memref<8x1xi32, #tpu.memory_space<vmem>>, vector<8x1xi32>
    %c256_i32 = arith.constant 256 : i32
    %29 = arith.muli %arg0, %c256_i32 : i32
    %30 = vector.broadcast %29 : i32 to vector<8x1xi32>
    %31 = arith.subi %28, %30 : vector<8x1xi32>
    %32 = vector.broadcast %31 : vector<8x1xi32> to vector<8x256xi32>
    %33 = arith.cmpi eq, %27, %32 : vector<8x256xi32>
    %34 = arith.select %33, %26, %10 : vector<8x256xi1>, vector<8x256xf32>
    %cst_14 = arith.constant 6.400000e+01 : f32
    %35 = vector.broadcast %cst_14 : f32 to vector<8x256xf32>
    %36 = arith.mulf %34, %35 : vector<8x256xf32>
    %c0_15 = arith.constant 0 : index
    %c0_16 = arith.constant 0 : index
    %37 = vector.load %arg4[%c0_15, %c0_16] : memref<8x256xf32, #tpu.memory_space<vmem>>, vector<8x256xf32>
    tpu.vector_store %arg4[%c0_15, %c0_16], %36 {strides = array<i32>} : memref<8x256xf32, #tpu.memory_space<vmem>>, vector<8x256xf32>,
    return
  }
  func.func @transform_0(%arg0: i32) -> (i32, i32) {
    %c0_i32 = arith.constant 0 : i32
    %c0_i32_0 = arith.constant 0 : i32
    %c0_i32_1 = arith.constant 0 : i32
    return %c0_i32, %c0_i32_0 : i32, i32
  }
  func.func @transform_1(%arg0: i32) -> (i32, i32) {
    %c0_i32 = arith.constant 0 : i32
    %c0_i32_0 = arith.constant 0 : i32
    return %arg0, %c0_i32 : i32, i32
  }
  func.func @transform_2(%arg0: i32) -> (i32, i32) {
    %c0_i32 = arith.constant 0 : i32
    %c0_i32_0 = arith.constant 0 : i32
    %c0_i32_1 = arith.constant 0 : i32
    return %c0_i32, %c0_i32_0 : i32, i32
  }
  func.func @transform_3(%arg0: i32) -> (i32, i32) {
    %c0_i32 = arith.constant 0 : i32
    %c0_i32_0 = arith.constant 0 : i32
    return %c0_i32, %arg0 : i32, i32
  }
}

</mosaic_0001>

<llo_original>
// kernel: tpu_custom_call.1
$region0: #{tpu_custom_call.1}
  #allocation0 [shape = 'u32[]', space=smem, size = 0x4, offset = 0x4, fixed_abs, tag = 'smem constant byte address 0x4 - core index']
  #allocation1 [shape = 'u32[144,128]{1,0:T(1,128)}', space=vmem, size = 0x12000, scoped, tag = 'internal scratch']
  %s0 = inlined_call_operand.vmem [shape: f32[8,128], index: 0, kind: input, shape index: {}]
  %s1 = inlined_call_operand.hbm [shape: f32[256,128], index: 1, kind: input, shape index: {}]
  %s2 = inlined_call_operand.vmem [shape: s32[8,1], index: 2, kind: input, shape index: {}]
  %s3 = inlined_call_operand.hbm [shape: f32[8,256], index: 3, kind: output, shape index: {}]
  %s4 = sld [smem:[#allocation0]]
  $region26: #{tpu_custom_call.1} parent=0
    _
  %s6 = ssub.s32 1, %s4
  %s7 = scalar_select 0, %s6, %s4
  $region1: #{tpu_custom_call.1} parent=0
    #allocation2 [shape = 'u8[131072]{0}', space=vmem, size = 0x20000, scoped, tag = 'input window, operand 1, single buffered']
    #allocation3 [shape = 's32[1]{0}', space=sflag, size = 0x4, scoped, tag = 'scoped memory for tpu_custom_call.1']
    #allocation4 [shape = 's32[1]{0}', space=sflag, size = 0x4, scoped, tag = 'scoped memory for tpu_custom_call.1']
    #allocation5 [shape = 'u8[8192]{0}', space=vmem, size = 0x2000, scoped, tag = 'output window, operand 0, single buffered']
    %8 = vsyncpa [#allocation3], 0
    %9 = vsyncpa [#allocation4], 0
    // Predicated region
    $region2: #{tpu_custom_call.1} parent=1 // pred_check
      _
    $region3: #{tpu_custom_call.1} parent=1 // pred_check_branch
      %11 = sbr.rel (0) target = $region5
    $region4: #{tpu_custom_call.1} parent=1 // pred_region
      _
    $region5: #{tpu_custom_call.1} parent=1 // pred_fallthru
      _
    // Predicated region
    $region6: #{tpu_custom_call.1} parent=1 // pred_check
      _
    $region7: #{tpu_custom_call.1} parent=1 // pred_check_branch
      %13 = sbr.rel (0) target = $region9
    $region8: #{tpu_custom_call.1} parent=1 // pred_region
      %s15 = ssub.s32 4096, 4096
      %16 = vsyncadd [#allocation3], %s15
      %s17 = sshll.u32 [#allocation2], 4
      %s18 = int_to_ptr.vmem [resolvable:$true] %s17
      %23 = dma.hbm_to_vmem [thread:$0]  %s1, 4096, %s18, [#allocation3], 128, 128, 8
    $region9: #{tpu_custom_call.1} parent=1 // pred_fallthru
      _
    // Predicated region
    $region10: #{tpu_custom_call.1} parent=1 // pred_check
      _
    $region11: #{tpu_custom_call.1} parent=1 // pred_check_branch
      %25 = sbr.rel (0) target = $region13
    $region12: #{tpu_custom_call.1} parent=1 // pred_region
      _
    $region13: #{tpu_custom_call.1} parent=1 // pred_fallthru
      _
    // Predicated region
    $region14: #{tpu_custom_call.1} parent=1 // pred_check
      _
    $region15: #{tpu_custom_call.1} parent=1 // pred_check_branch
      %27 = sbr.rel (0) target = $region17
    $region16: #{tpu_custom_call.1} parent=1 // pred_region
      %28 = dma.done [#allocation3], 4096
    $region17: #{tpu_custom_call.1} parent=1 // pred_fallthru
      _
    %v29 = vld [vmem:[%s0] sm:$0xff]
    %v30 = vld [vmem:[#allocation2] sm:$0xff]
    %v31 = vld [vmem:[#allocation2 + $0x8] sm:$0xff]
    %v32 = vld [vmem:[#allocation2 + $0x10] sm:$0xff]
    %v33 = vld [vmem:[#allocation2 + $0x18] sm:$0xff]
    %v34 = vld [vmem:[#allocation2 + $0x20] sm:$0xff]
    %v35 = vld [vmem:[#allocation2 + $0x28] sm:$0xff]
    %v36 = vld [vmem:[#allocation2 + $0x30] sm:$0xff]
    %v37 = vld [vmem:[#allocation2 + $0x38] sm:$0xff]
    %v38 = vld [vmem:[#allocation2 + $0x40] sm:$0xff]
    %v39 = vld [vmem:[#allocation2 + $0x48] sm:$0xff]
    %v40 = vld [vmem:[#allocation2 + $0x50] sm:$0xff]
    %v41 = vld [vmem:[#allocation2 + $0x58] sm:$0xff]
    %v42 = vld [vmem:[#allocation2 + $0x60] sm:$0xff]
    %v43 = vld [vmem:[#allocation2 + $0x68] sm:$0xff]
    %v44 = vld [vmem:[#allocation2 + $0x70] sm:$0xff]
    %v45 = vld [vmem:[#allocation2 + $0x78] sm:$0xff]
    %v46 = vld [vmem:[#allocation2 + $0x80] sm:$0xff]
    %v47 = vld [vmem:[#allocation2 + $0x88] sm:$0xff]
    %v48 = vld [vmem:[#allocation2 + $0x90] sm:$0xff]
    %v49 = vld [vmem:[#allocation2 + $0x98] sm:$0xff]
    %v50 = vld [vmem:[#allocation2 + $0xa0] sm:$0xff]
    %v51 = vld [vmem:[#allocation2 + $0xa8] sm:$0xff]
    %v52 = vld [vmem:[#allocation2 + $0xb0] sm:$0xff]
    %v53 = vld [vmem:[#allocation2 + $0xb8] sm:$0xff]
    %v54 = vld [vmem:[#allocation2 + $0xc0] sm:$0xff]
    %v55 = vld [vmem:[#allocation2 + $0xc8] sm:$0xff]
    %v56 = vld [vmem:[#allocation2 + $0xd0] sm:$0xff]
    %v57 = vld [vmem:[#allocation2 + $0xd8] sm:$0xff]
    %v58 = vld [vmem:[#allocation2 + $0xe0] sm:$0xff]
    %v59 = vld [vmem:[#allocation2 + $0xe8] sm:$0xff]
    %v60 = vld [vmem:[#allocation2 + $0xf0] sm:$0xff]
    %v61 = vld [vmem:[#allocation2 + $0xf8] sm:$0xff]
    %62 = vmatprep.subr.mxu0 0.0
    %63 = vmatpush1.xpose.msra.mxu0 %v30
    %64 = vmatprep.subr.mxu0 0.0
    %65 = vmatpush1.xpose.msra.mxu0 %v31
    %66 = vmatprep.subr.mxu0 0.0
    %67 = vmatpush1.xpose.msra.mxu0 %v32
    %68 = vmatprep.subr.mxu0 0.0
    %69 = vmatpush1.xpose.msra.mxu0 %v33
    %70 = vmatprep.subr.mxu0 0.0
    %71 = vmatpush1.xpose.msra.mxu0 %v34
    %72 = vmatprep.subr.mxu0 0.0
    %73 = vmatpush1.xpose.msra.mxu0 %v35
    %74 = vmatprep.subr.mxu0 0.0
    %75 = vmatpush1.xpose.msra.mxu0 %v36
    %76 = vmatprep.subr.mxu0 0.0
    %77 = vmatpush1.xpose.msra.mxu0 %v37
    %78 = vmatprep.subr.mxu0 0.0
    %79 = vmatpush1.xpose.msra.mxu0 %v38
    %80 = vmatprep.subr.mxu0 0.0
    %81 = vmatpush1.xpose.msra.mxu0 %v39
    %82 = vmatprep.subr.mxu0 0.0
    %83 = vmatpush1.xpose.msra.mxu0 %v40
    %84 = vmatprep.subr.mxu0 0.0
    %85 = vmatpush1.xpose.msra.mxu0 %v41
    %86 = vmatprep.subr.mxu0 0.0
    %87 = vmatpush1.xpose.msra.mxu0 %v42
    %88 = vmatprep.subr.mxu0 0.0
    %89 = vmatpush1.xpose.msra.mxu0 %v43
    %90 = vmatprep.subr.mxu0 0.0
    %91 = vmatpush1.xpose.msra.mxu0 %v44
    %92 = vmatprep.subr.mxu0 0.0
    %93 = vmatpush1.xpose.msra.mxu0 %v45
    %94 = vmatprep.subr.mxu0 0.0
    %95 = vmatpush1.xpose.msra.mxu0 %v46
    %96 = vmatprep.subr.mxu0 0.0
    %97 = vmatpush1.xpose.msra.mxu0 %v47
    %98 = vmatprep.subr.mxu0 0.0
    %99 = vmatpush1.xpose.msra.mxu0 %v48
    %100 = vmatprep.subr.mxu0 0.0
    %101 = vmatpush1.xpose.msra.mxu0 %v49
    %102 = vmatprep.subr.mxu0 0.0
    %103 = vmatpush1.xpose.msra.mxu0 %v50
    %104 = vmatprep.subr.mxu0 0.0
    %105 = vmatpush1.xpose.msra.mxu0 %v51
    %106 = vmatprep.subr.mxu0 0.0
    %107 = vmatpush1.xpose.msra.mxu0 %v52
    %108 = vmatprep.subr.mxu0 0.0
    %109 = vmatpush1.xpose.msra.mxu0 %v53
    %110 = vmatprep.subr.mxu0 0.0
    %111 = vmatpush1.xpose.msra.mxu0 %v54
    %112 = vmatprep.subr.mxu0 0.0
    %113 = vmatpush1.xpose.msra.mxu0 %v55
    %114 = vmatprep.subr.mxu0 0.0
    %115 = vmatpush1.xpose.msra.mxu0 %v56
    %116 = vmatprep.subr.mxu0 0.0
    %117 = vmatpush1.xpose.msra.mxu0 %v57
    %118 = vmatprep.subr.mxu0 0.0
    %119 = vmatpush1.xpose.msra.mxu0 %v58
    %120 = vmatprep.subr.mxu0 0.0
    %121 = vmatpush1.xpose.msra.mxu0 %v59
    %122 = vmatprep.subr.mxu0 0.0
    %123 = vmatpush1.xpose.msra.mxu0 %v60
    %124 = vmatprep.subr.mxu0 0.0
    %125 = vmatpush1.xpose.msra.mxu0 %v61
    %126 = vmatprep.mubr.f32.mxu0 0.0
    %127 = vmatmul.mubr.f32.gmra.mrb[0].mxu0 %v29
    %v128 = vpop.f32.mrb[0].mxu0
    %v129 = vadd.f32 0.0, %v128
    %v130 = vpop.f32.mrb[0].mxu0
    %v131 = vadd.f32 0.0, %v130
    %132 = vdwg.mxu0
    %v133 = vmul.f32 %v30, %v30
    %v134 = vmul.f32 %v31, %v31
    %v135 = vmul.f32 %v32, %v32
    %v136 = vmul.f32 %v33, %v33
    %v137 = vmul.f32 %v34, %v34
    %v138 = vmul.f32 %v35, %v35
    %v139 = vmul.f32 %v36, %v36
    %v140 = vmul.f32 %v37, %v37
    %v141 = vmul.f32 %v38, %v38
    %v142 = vmul.f32 %v39, %v39
    %v143 = vmul.f32 %v40, %v40
    %v144 = vmul.f32 %v41, %v41
    %v145 = vmul.f32 %v42, %v42
    %v146 = vmul.f32 %v43, %v43
    %v147 = vmul.f32 %v44, %v44
    %v148 = vmul.f32 %v45, %v45
    %v149 = vmul.f32 %v46, %v46
    %v150 = vmul.f32 %v47, %v47
    %v151 = vmul.f32 %v48, %v48
    %v152 = vmul.f32 %v49, %v49
    %v153 = vmul.f32 %v50, %v50
    %v154 = vmul.f32 %v51, %v51
    %v155 = vmul.f32 %v52, %v52
    %v156 = vmul.f32 %v53, %v53
    %v157 = vmul.f32 %v54, %v54
    %v158 = vmul.f32 %v55, %v55
    %v159 = vmul.f32 %v56, %v56
    %v160 = vmul.f32 %v57, %v57
    %v161 = vmul.f32 %v58, %v58
    %v162 = vmul.f32 %v59, %v59
    %v163 = vmul.f32 %v60, %v60
    %v164 = vmul.f32 %v61, %v61
    %165 = vmatprep.subr.mxu0 0.0
    %166 = vmatpush1.xpose.msra.mxu0 %v133
    %167 = vmatprep.subr.mxu0 0.0
    %168 = vmatpush1.xpose.msra.mxu0 %v134
    %169 = vmatprep.subr.mxu0 0.0
    %170 = vmatpush1.xpose.msra.mxu0 %v135
    %171 = vmatprep.subr.mxu0 0.0
    %172 = vmatpush1.xpose.msra.mxu0 %v136
    %173 = vmatprep.subr.mxu0 0.0
    %174 = vmatpush1.xpose.msra.mxu0 %v137
    %175 = vmatprep.subr.mxu0 0.0
    %176 = vmatpush1.xpose.msra.mxu0 %v138
    %177 = vmatprep.subr.mxu0 0.0
    %178 = vmatpush1.xpose.msra.mxu0 %v139
    %179 = vmatprep.subr.mxu0 0.0
    %180 = vmatpush1.xpose.msra.mxu0 %v140
    %181 = vmatprep.subr.mxu0 0.0
    %182 = vmatpush1.xpose.msra.mxu0 %v141
    %183 = vmatprep.subr.mxu0 0.0
    %184 = vmatpush1.xpose.msra.mxu0 %v142
    %185 = vmatprep.subr.mxu0 0.0
    %186 = vmatpush1.xpose.msra.mxu0 %v143
    %187 = vmatprep.subr.mxu0 0.0
    %188 = vmatpush1.xpose.msra.mxu0 %v144
    %189 = vmatprep.subr.mxu0 0.0
    %190 = vmatpush1.xpose.msra.mxu0 %v145
    %191 = vmatprep.subr.mxu0 0.0
    %192 = vmatpush1.xpose.msra.mxu0 %v146
    %193 = vmatprep.subr.mxu0 0.0
    %194 = vmatpush1.xpose.msra.mxu0 %v147
    %195 = vmatprep.subr.mxu0 0.0
    %196 = vmatpush1.xpose.msra.mxu0 %v148
    %197 = vmatprep.subr.mxu0 0.0
    %198 = vmatpush1.xpose.msra.mxu0 %v149
    %199 = vmatprep.subr.mxu0 0.0
    %200 = vmatpush1.xpose.msra.mxu0 %v150
    %201 = vmatprep.subr.mxu0 0.0
    %202 = vmatpush1.xpose.msra.mxu0 %v151
    %203 = vmatprep.subr.mxu0 0.0
    %204 = vmatpush1.xpose.msra.mxu0 %v152
    %205 = vmatprep.subr.mxu0 0.0
    %206 = vmatpush1.xpose.msra.mxu0 %v153
    %207 = vmatprep.subr.mxu0 0.0
    %208 = vmatpush1.xpose.msra.mxu0 %v154
    %209 = vmatprep.subr.mxu0 0.0
    %210 = vmatpush1.xpose.msra.mxu0 %v155
    %211 = vmatprep.subr.mxu0 0.0
    %212 = vmatpush1.xpose.msra.mxu0 %v156
    %213 = vmatprep.subr.mxu0 0.0
    %214 = vmatpush1.xpose.msra.mxu0 %v157
    %215 = vmatprep.subr.mxu0 0.0
    %216 = vmatpush1.xpose.msra.mxu0 %v158
    %217 = vmatprep.subr.mxu0 0.0
    %218 = vmatpush1.xpose.msra.mxu0 %v159
    %219 = vmatprep.subr.mxu0 0.0
    %220 = vmatpush1.xpose.msra.mxu0 %v160
    %221 = vmatprep.subr.mxu0 0.0
    %222 = vmatpush1.xpose.msra.mxu0 %v161
    %223 = vmatprep.subr.mxu0 0.0
    %224 = vmatpush1.xpose.msra.mxu0 %v162
    %225 = vmatprep.subr.mxu0 0.0
    %226 = vmatpush1.xpose.msra.mxu0 %v163
    %227 = vmatprep.subr.mxu0 0.0
    %228 = vmatpush1.xpose.msra.mxu0 %v164
    %229 = vmatprep.mubr.f32.mxu0 0.0
    %230 = vmatmul.mubr.f32.gmra.mrb[0].mxu0 1.0
    %v231 = vpop.f32.mrb[0].mxu0
    %v232 = vadd.f32 0.0, %v231
    %v233 = vpop.f32.mrb[0].mxu0
    %v234 = vadd.f32 0.0, %v233
    %235 = vdwg.mxu0
    %v236 = vmax.f32 %v232, 1e-24
    %v237 = vmax.f32 %v234, 1e-24
    %v238 = vrsqrt.pop %v236
    %v239 = vrsqrt.pop %v237
    %v240 = vlaneseq
    %v241 = vshrl.u32 %v240, 7
    %v242 = vsub.s32 0, %v241
    %v243 = vrot.slane %v238, %v242
    %v244 = vlaneseq
    %v245 = vshrl.u32 %v244, 7
    %v246 = vsub.s32 0, %v245
    %v247 = vrot.slane %v239, %v246
    %v248 = vmul.f32 %v129, %v243
    %v249 = vmul.f32 %v131, %v247
    %v250 = vmul.f32 %v248, %v248
    %v251 = vmul.f32 %v249, %v249
    %v252 = vsub.f32 1.0, %v250
    %v253 = vsub.f32 1.0, %v251
    %v254 = vmax.f32 %v252, 0.0
    %v255 = vmax.f32 %v253, 0.0
    %v256 = vrsqrt.pop %v254
    %v257 = vmul.f32 %v254, %v256
    %vm258 = vcmp.eq.f32.partialorder %v254, inf
    %v259 = vsel %vm258, %v254, %v257
    %vm260 = vcmp.eq.f32.partialorder %v254, 0.0
    %v261 = vand.u32 %v254, 2147483648
    %v262 = vsel %vm260, %v261, %v259
    %v263 = vrsqrt.pop %v255
    %v264 = vmul.f32 %v255, %v263
    %vm265 = vcmp.eq.f32.partialorder %v255, inf
    %v266 = vsel %vm265, %v255, %v264
    %vm267 = vcmp.eq.f32.partialorder %v255, 0.0
    %v268 = vand.u32 %v255, 2147483648
    %v269 = vsel %vm267, %v268, %v266
    %v270 = vmul.f32 %v248, 0.87758255
    %v271 = vmul.f32 %v249, 0.87758255
    %v272 = vmul.f32 %v262, 0.47942555
    %v273 = vmul.f32 %v269, 0.47942555
    %v274 = vsub.f32 %v270, %v272
    %v275 = vsub.f32 %v271, %v273
    %vm276 = vcmp.gt.f32.partialorder %v248, -0.87758255
    %vm277 = vcmp.gt.f32.partialorder %v249, -0.87758255
    %v278 = vsub.f32 %v248, 0.23971277
    %v279 = vsub.f32 %v249, 0.23971277
    %v280 = vsel %vm276, %v274, %v278
    %v281 = vsel %vm277, %v275, %v279
    %v282 = vlaneseq
    %v283 = vand.u32 %v282, 127
    %v284 = vadd.s32 %v283, 128
    %v285 = vld [vmem:[%s2] sm:$0xff]
    %s286 = smul.u32 0, 256
    %v287 = vstv %s286
    %v288 = vsub.s32 %v285, %v287
    %289 = vset.pattern.permute.xlu0 0
    %290 = vperm.xlu0 %289, %v288
    %v291 = vpop.permute.xlu0 %290
    %vm292 = vcmp.eq.s32.totalorder %v283, %v291
    %vm293 = vcmp.eq.s32.totalorder %v284, %v291
    %v294 = vsel %vm292, %v280, %v248
    %v295 = vsel %vm293, %v281, %v249
    %v296 = vmul.f32 %v294, 64.0
    %v297 = vmul.f32 %v295, 64.0
    %298 = vst [vmem:[#allocation5] sm:$0xff] %v296
    %299 = vst [vmem:[#allocation5 + $0x8] sm:$0xff] %v297
    // Predicated region
    $region18: #{tpu_custom_call.1} parent=1 // pred_check
      _
    $region19: #{tpu_custom_call.1} parent=1 // pred_check_branch
      %301 = sbr.rel (0) target = $region21
    $region20: #{tpu_custom_call.1} parent=1 // pred_region
      %s303 = ssub.s32 256, 256
      %304 = vsyncadd [#allocation4], %s303
      %s306 = sshll.u32 [#allocation5], 4
      %s307 = int_to_ptr.vmem [resolvable:$true] %s306
      %309 = dma.vmem_to_hbm [thread:$0]  %s307, 256, %s3, [#allocation4]
    $region21: #{tpu_custom_call.1} parent=1 // pred_fallthru
      _
    // Predicated region
    $region22: #{tpu_custom_call.1} parent=1 // pred_check
      _
    $region23: #{tpu_custom_call.1} parent=1 // pred_check_branch
      %311 = sbr.rel (0) target = $region25
    $region24: #{tpu_custom_call.1} parent=1 // pred_region
      %312 = dma.done [#allocation4], 256
    $region25: #{tpu_custom_call.1} parent=1 // pred_fallthru
      _
    %313 = vsyncpa [#allocation3], 1
    %314 = vsyncpa [#allocation4], 1

</llo_original>
